<compile_context>
chip_gen: v6e
topology: v6e:2x2x1
jax: 0.10.0
libtpu: 0.0.40
codegen_flags: <defaults>
</compile_context>

<pallas_src>
import jax
import jax.numpy as jnp
from jax.experimental import pallas as pl
from jax.experimental.pallas import tpu as pltpu


def _round_up(x, m):
    return ((x + m - 1) // m) * m


def _vmem_budget_and_limit():
    """Generation-aware block budget (bytes) and scoped VMEM limit to request."""
    try:
        info = pltpu.get_tpu_info()
        cap = int(getattr(info, "vmem_capacity_bytes", 64 * 1024 * 1024))
    except Exception:  # no TPU visible at trace time; be conservative
        cap = 64 * 1024 * 1024
    # 32 MiB on v5e/v6e (128 MiB physical) and on v7x (64 MiB physical / 2).
    limit = min(cap // 2, 32 * 1024 * 1024)
    budget = (limit * 3) // 4          # headroom for compiler scratch / spills
    return budget, limit


def _pick_tiling(n, hw, c_in, c_out, budget_bytes):
    """Choose (nb, hw_tile).

    Footprint accounts for double-buffering, sublane padding of the channel
    axes and the resident (but still double-buffered) weight/bias blocks.
    """
    c_in_p = _round_up(c_in, 8)
    c_out_p = _round_up(c_out, 8)
    # Weight (C_out, C_in) and bias (C_out, 1): lane dim pads to 128, x2 buffers.
    fixed = 2 * c_out_p * _round_up(c_in, 128) * 4 + 2 * c_out_p * 128 * 4
    avail = max(budget_bytes - fixed, 1 << 19)
    per_lane = 2 * (c_in_p + c_out_p) * 4      # x block + out block, 2 buffers, f32

    hw_pad = _round_up(hw, 128)
    max_lanes = max(128, (avail // per_lane) // 128 * 128)

    if hw_pad <= max_lanes:
        # Whole image fits in one block: pack batches to amortize per-step cost
        # and turn many small strided DMAs into one large contiguous transfer.
        nb = max(1, int(avail // (per_lane * hw_pad)))
        nb = min(nb, n, 16)
        hw_tile = hw                            # full extent (legal even if % 128 != 0)
        # v7x has 2 TensorCores: if the grid would collapse to a single step on
        # a non-trivial problem, split HW in two so both cores get work.
        if n == 1 and nb == 1 and hw % 256 == 0 and hw // 2 >= 512 and \
                hw * (c_in_p + c_out_p) * 4 > (4 << 20):
            hw_tile = hw // 2
        return nb, hw_tile

    # Large image: tile HW with a 128-multiple tile (cdiv grid handles the
    # ragged tail); keep rows >= 512 lanes (>= 2 KiB DMA rows).
    hw_tile = min(hw_pad, max_lanes)
    hw_tile = max(hw_tile, min(512, hw_pad))
    return 1, hw_tile


def _make_kernel(nb):
    def _one(x2d, w, b):
        acc = jnp.dot(w, x2d, preferred_element_type=jnp.float32)
        acc = acc + b                                   # bias broadcast along lanes
        # sigmoid = 1 / (1 + exp(-x)): exp + approximate reciprocal both on EUP.
        return pl.reciprocal(1.0 + jnp.exp(-acc), approx=True)

    if nb == 1:
        def kernel(x_ref, w_ref, b_ref, o_ref):
            # x_ref: (C_in, T), w_ref: (C_out, C_in), b_ref: (C_out, 1), o_ref: (C_out, T)
            o_ref[...] = _one(x_ref[...], w_ref[...], b_ref[...]).astype(o_ref.dtype)
        return kernel

    def kernel(x_ref, w_ref, b_ref, o_ref):
        # x_ref: (nb, C_in, T), o_ref: (nb, C_out, T)
        w = w_ref[...]
        b = b_ref[...]
        for i in range(nb):                             # static, unrolled
            o_ref[i] = _one(x_ref[i], w, b).astype(o_ref.dtype)
    return kernel


def conv1x1_sigmoid(x_nchw, weight, bias):
    """1x1 Conv2d (stride 1, no padding) + sigmoid, matching PyTorch semantics.

    x_nchw: (N, C_in, H, W) float32
    weight: (C_out, C_in, 1, 1) float32
    bias:   (C_out,) float32
    returns (N, C_out, H, W) float32
    """
    N, C_in, H, W = x_nchw.shape
    C_out = weight.shape[0]
    HW = H * W

    x3 = x_nchw.reshape(N, C_in, HW)            # free reshape, no transpose
    w_mat = weight.reshape(C_out, C_in)         # (C_out, C_in)
    b_col = bias.reshape(C_out, 1)              # (C_out, 1)

    budget, vmem_limit = _vmem_budget_and_limit()
    nb, hw_tile = _pick_tiling(N, HW, C_in, C_out, budget)
    grid = (pl.cdiv(N, nb), pl.cdiv(HW, hw_tile))

    if nb == 1:
        x_spec = pl.BlockSpec((pl.Squeezed(), C_in, hw_tile), lambda b, j: (b, 0, j))
        o_spec = pl.BlockSpec((pl.Squeezed(), C_out, hw_tile), lambda b, j: (b, 0, j))
    else:
        x_spec = pl.BlockSpec((nb, C_in, hw_tile), lambda b, j: (b, 0, j))
        o_spec = pl.BlockSpec((nb, C_out, hw_tile), lambda b, j: (b, 0, j))

    out3 = pl.pallas_call(
        _make_kernel(nb),
        out_shape=jax.ShapeDtypeStruct((N, C_out, HW), jnp.float32),
        grid_spec=pltpu.PrefetchScalarGridSpec(
            num_scalar_prefetch=0,
            grid=grid,
            in_specs=[
                x_spec,
                pl.BlockSpec((C_out, C_in), lambda b, j: (0, 0)),   # weights resident
                pl.BlockSpec((C_out, 1), lambda b, j: (0, 0)),      # bias resident
            ],
            out_specs=o_spec,
        ),
        compiler_params=pltpu.CompilerParams(
            dimension_semantics=("parallel", "parallel"),
            vmem_limit_bytes=vmem_limit,
        ),
    )(x3, w_mat, b_col)

    # (N, C_out, HW) -> (N, C_out, H, W): free reshape
    return out3.reshape(N, C_out, H, W)


if __name__ == "__main__":
    key = jax.random.PRNGKey(0)
    kx, kw, kb = jax.random.split(key, 3)

    # Shapes from the PyTorch module spec: x1 = randn(1, 50, 16, 16), Conv2d(50, 27, 1)
    N, C_in, H, W = 1, 50, 16, 16
    C_out = 27

    x = jax.random.normal(kx, (N, C_in, H, W), dtype=jnp.float32)
    # PyTorch default Conv2d init range ~ U(-1/sqrt(fan_in), +1/sqrt(fan_in))
    bound = 1.0 / jnp.sqrt(jnp.float32(C_in))
    weight = jax.random.uniform(kw, (C_out, C_in, 1, 1), dtype=jnp.float32,
                                minval=-bound, maxval=bound)
    bias = jax.random.uniform(kb, (C_out,), dtype=jnp.float32,
                              minval=-bound, maxval=bound)

    out = conv1x1_sigmoid(x, weight, bias)
    jax.block_until_ready(out)

    # Reference check in plain JAX (tolerance loosened slightly for the
    # EUP approximate reciprocal used in the fused sigmoid).
    ref = jax.nn.sigmoid(
        jnp.einsum("nchw,oc->nohw", x, weight.reshape(C_out, C_in))
        + bias.reshape(1, C_out, 1, 1)
    )
    assert out.shape == (N, C_out, H, W), out.shape
    assert jnp.allclose(out, ref, atol=2e-3, rtol=2e-3), "mismatch vs reference"

    print("KERNEL_OK")
</pallas_src>

<mosaic_0001>
module attributes {stable_mosaic.version = 11 : i64} {
  func.func @kernel(%arg0: i32, %arg1: i32, %arg2: memref<1x50x256xf32, #tpu.memory_space<vmem>>, %arg3: memref<27x50xf32, #tpu.memory_space<vmem>>, %arg4: memref<27x1xf32, #tpu.memory_space<vmem>>, %arg5: memref<1x27x256xf32, #tpu.memory_space<vmem>>) attributes {dimension_semantics = [#tpu.dimension_semantics<parallel>, #tpu.dimension_semantics<parallel>], iteration_bounds = array<i64: 1, 1>, scalar_prefetch = 0 : i64, scratch_operands = 0 : i64, tpu.core_type = #tpu.core_type<tc>, window_params = [{transform_indices = @transform_0, window_bounds = array<i64: 1, 50, 256>}, {pipeline_mode = #tpu.pipeline_mode<synchronous>, transform_indices = @transform_1, window_bounds = array<i64: 27, 50>}, {pipeline_mode = #tpu.pipeline_mode<synchronous>, transform_indices = @transform_2, window_bounds = array<i64: 27, 1>}, {transform_indices = @transform_3, window_bounds = array<i64: 1, 27, 256>}]} {
    %c0 = arith.constant 0 : index
    %c0_0 = arith.constant 0 : index
    %c0_1 = arith.constant 0 : index
    %0 = vector.load %arg2[%c0, %c0_0, %c0_1] : memref<1x50x256xf32, #tpu.memory_space<vmem>>, vector<1x50x256xf32>
    %1 = vector.shape_cast %0 : vector<1x50x256xf32> to vector<50x256xf32>
    %c0_2 = arith.constant 0 : index
    %c0_3 = arith.constant 0 : index
    %2 = vector.load %arg3[%c0_2, %c0_3] : memref<27x50xf32, #tpu.memory_space<vmem>>, vector<27x50xf32>
    %c0_4 = arith.constant 0 : index
    %c0_5 = arith.constant 0 : index
    %3 = vector.load %arg4[%c0_4, %c0_5] : memref<27x1xf32, #tpu.memory_space<vmem>>, vector<27x1xf32>
    %cst = arith.constant dense<0.000000e+00> : vector<27x256xf32>
    %4 = tpu.matmul %2, %1, %cst {dimension_numbers = #tpu.dot_dimension_numbers<[1], [0], [0], [1], [0, 0, 1, 1], [], []>} : vector<27x50xf32>, vector<50x256xf32>, vector<27x256xf32> -> vector<27x256xf32>
    %5 = vector.broadcast %3 : vector<27x1xf32> to vector<27x256xf32>
    %6 = arith.addf %4, %5 : vector<27x256xf32>
    %cst_6 = arith.constant 0.000000e+00 : f32
    %7 = vector.broadcast %cst_6 : f32 to vector<27x256xf32>
    %8 = arith.subf %7, %6 : vector<27x256xf32>
    %9 = math.exp %8 : vector<27x256xf32>
    %cst_7 = arith.constant 1.000000e+00 : f32
    %10 = vector.broadcast %cst_7 : f32 to vector<27x256xf32>
    %11 = arith.addf %10, %9 : vector<27x256xf32>
    %12 = tpu.reciprocal %11 {approx = true} : vector<27x256xf32> -> vector<27x256xf32>
    %c0_8 = arith.constant 0 : index
    %c0_9 = arith.constant 0 : index
    %c0_10 = arith.constant 0 : index
    %13 = vector.load %arg5[%c0_8, %c0_9, %c0_10] : memref<1x27x256xf32, #tpu.memory_space<vmem>>, vector<1x27x256xf32>
    %14 = vector.shape_cast %13 : vector<1x27x256xf32> to vector<27x256xf32>
    %15 = vector.shape_cast %12 : vector<27x256xf32> to vector<1x27x256xf32>
    tpu.vector_store %arg5[%c0_8, %c0_9, %c0_10], %15 {strides = array<i32>} : memref<1x27x256xf32, #tpu.memory_space<vmem>>, vector<1x27x256xf32>,
    return
  }
  func.func @transform_0(%arg0: i32, %arg1: i32) -> (i32, i32, i32) {
    %c0_i32 = arith.constant 0 : i32
    %c0_i32_0 = arith.constant 0 : i32
    return %arg0, %c0_i32, %arg1 : i32, i32, i32
  }
  func.func @transform_1(%arg0: i32, %arg1: i32) -> (i32, i32) {
    %c0_i32 = arith.constant 0 : i32
    %c0_i32_0 = arith.constant 0 : i32
    %c0_i32_1 = arith.constant 0 : i32
    return %c0_i32, %c0_i32_0 : i32, i32
  }
  func.func @transform_2(%arg0: i32, %arg1: i32) -> (i32, i32) {
    %c0_i32 = arith.constant 0 : i32
    %c0_i32_0 = arith.constant 0 : i32
    %c0_i32_1 = arith.constant 0 : i32
    return %c0_i32, %c0_i32_0 : i32, i32
  }
  func.func @transform_3(%arg0: i32, %arg1: i32) -> (i32, i32, i32) {
    %c0_i32 = arith.constant 0 : i32
    %c0_i32_0 = arith.constant 0 : i32
    return %arg0, %c0_i32, %arg1 : i32, i32, i32
  }
}

</mosaic_0001>

<llo_original>
// kernel: tpu_custom_call.1
$region0: #{tpu_custom_call.1}
  #allocation0 [shape = 'u32[]', space=smem, size = 0x4, offset = 0x4, fixed_abs, tag = 'smem constant byte address 0x4 - core index']
  #allocation1 [shape = 'u32[144,128]{1,0:T(1,128)}', space=vmem, size = 0x12000, scoped, tag = 'internal scratch']
  %s0 = inlined_call_operand.vmem [shape: f32[1,50,256], index: 0, kind: input, shape index: {}]
  %s1 = inlined_call_operand.vmem [shape: f32[27,50], index: 1, kind: input, shape index: {}]
  %s2 = inlined_call_operand.vmem [shape: f32[27,1], index: 2, kind: input, shape index: {}]
  %s3 = inlined_call_operand.vmem [shape: f32[1,27,256], index: 3, kind: output, shape index: {}]
  %s4 = sld [smem:[#allocation0]]
  $region22: #{tpu_custom_call.1} parent=0
    _
  %s6 = ssub.s32 1, %s4
  %s7 = scalar_select 0, %s6, %s4
  // Predicated region
  $region2: #{tpu_custom_call.1} parent=0 // pred_check
    _
  $region3: #{tpu_custom_call.1} parent=0 // pred_check_branch
    %9 = sbr.rel (0) target = $region5
  $region4: #{tpu_custom_call.1} parent=0 // pred_region
    _
  $region5: #{tpu_custom_call.1} parent=0 // pred_fallthru
    _
  // Predicated region
  $region6: #{tpu_custom_call.1} parent=0 // pred_check
    _
  $region7: #{tpu_custom_call.1} parent=0 // pred_check_branch
    %11 = sbr.rel (0) target = $region9
  $region8: #{tpu_custom_call.1} parent=0 // pred_region
    _
  $region9: #{tpu_custom_call.1} parent=0 // pred_fallthru
    _
  // Predicated region
  $region10: #{tpu_custom_call.1} parent=0 // pred_check
    _
  $region11: #{tpu_custom_call.1} parent=0 // pred_check_branch
    %13 = sbr.rel (0) target = $region13
  $region12: #{tpu_custom_call.1} parent=0 // pred_region
    _
  $region13: #{tpu_custom_call.1} parent=0 // pred_fallthru
    _
  %v14 = vld [vmem:[%s0] sm:$0xff]
  %v15 = vld [vmem:[%s0 + $0x8] sm:$0xff]
  %v16 = vld [vmem:[%s0 + $0x10] sm:$0xff]
  %v17 = vld [vmem:[%s0 + $0x18] sm:$0xff]
  %v18 = vld [vmem:[%s0 + $0x20] sm:$0xff]
  %v19 = vld [vmem:[%s0 + $0x28] sm:$0xff]
  %v20 = vld [vmem:[%s0 + $0x30] sm:$0xff]
  %v21 = vld [vmem:[%s0 + $0x38] sm:$0xff]
  %v22 = vld [vmem:[%s0 + $0x40] sm:$0xff]
  %v23 = vld [vmem:[%s0 + $0x48] sm:$0xff]
  %v24 = vld [vmem:[%s0 + $0x50] sm:$0xff]
  %v25 = vld [vmem:[%s0 + $0x58] sm:$0xff]
  %v26 = vld [vmem:[%s0 + $0x60] sm:$0x3]
  %v27 = vld [vmem:[%s0 + $0x68] sm:$0x3]
  %v28 = vld [vmem:[%s1] sm:$0xff]
  %v29 = vld [vmem:[%s1 + $0x8] sm:$0xff]
  %v30 = vld [vmem:[%s1 + $0x10] sm:$0xff]
  %v31 = vld [vmem:[%s1 + $0x18] sm:$0x7]
  %v32 = vld [vmem:[%s2] sm:$0xff]
  %v33 = vld [vmem:[%s2 + $0x8] sm:$0xff]
  %v34 = vld [vmem:[%s2 + $0x10] sm:$0xff]
  %v35 = vld [vmem:[%s2 + $0x18] sm:$0x7]
  %37 = vset.pattern.permute.xlu0 0
  %38 = vperm.xlu0 %37, %v32
  %v39 = vpop.permute.xlu0 %38
  %42 = vset.pattern.permute.xlu0 0
  %43 = vperm.xlu0 %42, %v33
  %v44 = vpop.permute.xlu0 %43
  %47 = vset.pattern.permute.xlu0 0
  %48 = vperm.xlu0 %47, %v34
  %v49 = vpop.permute.xlu0 %48
  %52 = vset.pattern.permute.xlu0 0
  %53 = vperm.xlu0 %52, %v35
  %v54 = vpop.permute.xlu0 %53
  %vm56 = vcmask 408576
  %v58 = vsel %vm56, %v28, 0
  %v61 = vsel %vm56, %v29, 0
  %v64 = vsel %vm56, %v30, 0
  %v67 = vsel %vm56, %v31, 0
  %vm69 = vcmask 1041408
  %v71 = vsel %vm69, %v26, 0
  %v74 = vsel %vm69, %v27, 0
  %76 = vmatprep.subr.mxu0 0.0
  %77 = vmatpush1.msra.mxu0 0.0
  %78 = vmatprep.subr.mxu0 0.0
  %79 = vmatpush1.msra.mxu0 0.0
  %80 = vmatprep.subr.mxu0 0.0
  %81 = vmatpush1.msra.mxu0 0.0
  %82 = vmatprep.subr.mxu0 0.0
  %83 = vmatpush1.msra.mxu0 0.0
  %84 = vmatprep.subr.mxu0 0.0
  %85 = vmatpush1.msra.mxu0 0.0
  %86 = vmatprep.subr.mxu0 0.0
  %87 = vmatpush1.msra.mxu0 0.0
  %88 = vmatprep.subr.mxu0 0.0
  %89 = vmatpush1.msra.mxu0 0.0
  %90 = vmatprep.subr.mxu0 0.0
  %91 = vmatpush1.msra.mxu0 0.0
  %92 = vmatprep.subr.mxu0 0.0
  %93 = vmatpush1.msra.mxu0 0.0
  %94 = vmatprep.subr.mxu0 %v74
  %95 = vmatpush1.msra.mxu0 %v71
  %96 = vmatprep.subr.mxu0 %v25
  %97 = vmatpush1.msra.mxu0 %v24
  %98 = vmatprep.subr.mxu0 %v23
  %99 = vmatpush1.msra.mxu0 %v22
  %100 = vmatprep.subr.mxu0 %v21
  %101 = vmatpush1.msra.mxu0 %v20
  %102 = vmatprep.subr.mxu0 %v19
  %103 = vmatpush1.msra.mxu0 %v18
  %104 = vmatprep.subr.mxu0 %v17
  %105 = vmatpush1.msra.mxu0 %v16
  %106 = vmatprep.subr.mxu0 %v15
  %107 = vmatpush1.msra.mxu0 %v14
  %108 = vmatprep.subr.mxu0 0.0
  %109 = vmatpush2.msra.mxu0 0.0
  %110 = vmatprep.subr.mxu0 0.0
  %111 = vmatpush2.msra.mxu0 0.0
  %112 = vmatprep.subr.mxu0 0.0
  %113 = vmatpush2.msra.mxu0 0.0
  %114 = vmatprep.subr.mxu0 0.0
  %115 = vmatpush2.msra.mxu0 0.0
  %116 = vmatprep.subr.mxu0 0.0
  %117 = vmatpush2.msra.mxu0 0.0
  %118 = vmatprep.subr.mxu0 0.0
  %119 = vmatpush2.msra.mxu0 0.0
  %120 = vmatprep.subr.mxu0 0.0
  %121 = vmatpush2.msra.mxu0 0.0
  %122 = vmatprep.subr.mxu0 0.0
  %123 = vmatpush2.msra.mxu0 0.0
  %124 = vmatprep.subr.mxu0 0.0
  %125 = vmatpush2.msra.mxu0 0.0
  %126 = vmatprep.subr.mxu0 0.0
  %127 = vmatpush2.msra.mxu0 0.0
  %128 = vmatprep.subr.mxu0 0.0
  %129 = vmatpush2.msra.mxu0 0.0
  %130 = vmatprep.subr.mxu0 0.0
  %131 = vmatpush2.msra.mxu0 0.0
  %132 = vmatprep.subr.mxu0 0.0
  %133 = vmatpush2.msra.mxu0 0.0
  %134 = vmatprep.subr.mxu0 0.0
  %135 = vmatpush2.msra.mxu0 0.0
  %136 = vmatprep.subr.mxu0 0.0
  %137 = vmatpush2.msra.mxu0 0.0
  %138 = vmatprep.subr.mxu0 0.0
  %139 = vmatpush2.msra.mxu0 0.0
  %140 = vmatprep.mubr.f32.mxu0 0.0
  %141 = vmatmul.mubr.f32.gmra.mxu0 %v58
  %v142 = vpop.f32.mrf.mxu0
  %v143 = vadd.f32 %v39, %v142
  %v144 = vpop.f32.mrf.mxu0
  %v145 = vadd.f32 %v39, %v144
  %146 = vmatprep.mubr.f32.mxu0 0.0
  %147 = vmatmul.mubr.f32.gmra.mxu0 %v61
  %v148 = vpop.f32.mrf.mxu0
  %v149 = vadd.f32 %v44, %v148
  %v150 = vpop.f32.mrf.mxu0
  %v151 = vadd.f32 %v44, %v150
  %152 = vmatprep.mubr.f32.mxu0 0.0
  %153 = vmatmul.mubr.f32.gmra.mxu0 %v64
  %v154 = vpop.f32.mrf.mxu0
  %v155 = vadd.f32 %v49, %v154
  %v156 = vpop.f32.mrf.mxu0
  %v157 = vadd.f32 %v49, %v156
  %158 = vmatprep.mubr.f32.mxu0 0.0
  %159 = vmatmul.mubr.f32.gmra.mxu0 %v67
  %v160 = vpop.f32.mrf.mxu0
  %v161 = vadd.f32 %v54, %v160
  %v162 = vpop.f32.mrf.mxu0
  %v163 = vadd.f32 %v54, %v162
  %164 = vdwg.mxu0
  %v165 = vsub.f32 0.0, %v143
  %v166 = vsub.f32 0.0, %v145
  %v167 = vsub.f32 0.0, %v149
  %v168 = vsub.f32 0.0, %v151
  %v169 = vsub.f32 0.0, %v155
  %v170 = vsub.f32 0.0, %v157
  %v171 = vsub.f32 0.0, %v161
  %v172 = vsub.f32 0.0, %v163
  %v173 = vmul.f32 %v165, 1.442695
  %v174 = vpow.pop %v173
  %v175 = vmul.f32 %v166, 1.442695
  %v176 = vpow.pop %v175
  %v177 = vmul.f32 %v167, 1.442695
  %v178 = vpow.pop %v177
  %v179 = vmul.f32 %v168, 1.442695
  %v180 = vpow.pop %v179
  %v181 = vmul.f32 %v169, 1.442695
  %v182 = vpow.pop %v181
  %v183 = vmul.f32 %v170, 1.442695
  %v184 = vpow.pop %v183
  %v185 = vmul.f32 %v171, 1.442695
  %v186 = vpow.pop %v185
  %v187 = vmul.f32 %v172, 1.442695
  %v188 = vpow.pop %v187
  %v189 = vadd.f32 %v174, 1.0
  %v190 = vadd.f32 %v176, 1.0
  %v191 = vadd.f32 %v178, 1.0
  %v192 = vadd.f32 %v180, 1.0
  %v193 = vadd.f32 %v182, 1.0
  %v194 = vadd.f32 %v184, 1.0
  %v195 = vadd.f32 %v186, 1.0
  %v196 = vadd.f32 %v188, 1.0
  %v197 = vrcp.pop %v189
  %v198 = vrcp.pop %v190
  %v199 = vrcp.pop %v191
  %v200 = vrcp.pop %v192
  %v201 = vrcp.pop %v193
  %v202 = vrcp.pop %v194
  %v203 = vrcp.pop %v195
  %v204 = vrcp.pop %v196
  %205 = vst [vmem:[%s3] sm:$0xff] %v197
  %206 = vst [vmem:[%s3 + $0x8] sm:$0xff] %v198
  %207 = vst [vmem:[%s3 + $0x10] sm:$0xff] %v199
  %208 = vst [vmem:[%s3 + $0x18] sm:$0xff] %v200
  %209 = vst [vmem:[%s3 + $0x20] sm:$0xff] %v201
  %210 = vst [vmem:[%s3 + $0x28] sm:$0xff] %v202
  %211 = vst [vmem:[%s3 + $0x30] sm:$0x7] %v203
  %212 = vst [vmem:[%s3 + $0x38] sm:$0x7] %v204
  // Predicated region
  $region14: #{tpu_custom_call.1} parent=0 // pred_check
    _
  $region15: #{tpu_custom_call.1} parent=0 // pred_check_branch
    %214 = sbr.rel (0) target = $region17
  $region16: #{tpu_custom_call.1} parent=0 // pred_region
    _
  $region17: #{tpu_custom_call.1} parent=0 // pred_fallthru
    _
  // Predicated region
  $region18: #{tpu_custom_call.1} parent=0 // pred_check
    _
  $region19: #{tpu_custom_call.1} parent=0 // pred_check_branch
    %216 = sbr.rel (0) target = $region21
  $region20: #{tpu_custom_call.1} parent=0 // pred_region
    _
  $region21: #{tpu_custom_call.1} parent=0 // pred_fallthru
    _

</llo_original>
